<compile_context>
chip_gen: v5e
topology: v5e:2x2
jax: 0.10.0
libtpu: 0.0.40
codegen_flags: <defaults>
</compile_context>

<pallas_src>
import jax
import jax.numpy as jnp
from jax import lax
from jax.experimental import pallas as pl
from jax.experimental.pallas import tpu as pltpu

EPS = 1e-12


def _round_up(n: int, m: int) -> int:
    return ((n + m - 1) // m) * m


def _make_kernel(cmd: str, has_prev: bool):
    """Build a fused kernel executing the process_cmd sequence in VMEM."""
    has_norm = "n" in cmd

    def kernel(*refs):
        if has_prev:
            x_ref, prev_ref, gamma_ref, beta_ref, o_ref = refs
        else:
            x_ref, gamma_ref, beta_ref, o_ref = refs

        x = x_ref[...].astype(jnp.float32)
        # Hoisted loads/casts: done once, not once per cmd character.
        prev = prev_ref[...].astype(jnp.float32) if has_prev else None
        gamma = gamma_ref[...] if has_norm else None  # (1, H) f32
        beta = beta_ref[...] if has_norm else None    # (1, H) f32

        for c in cmd:
            if c == "a":
                if prev is not None:
                    x = x + prev
            elif c == "n":
                # Two-pass (shift-based) variance: numerically robust, matches
                # the PyTorch GranLayerNorm exactly.
                mean = jnp.mean(x, axis=-1, keepdims=True)
                shift = x - mean
                var = jnp.mean(shift * shift, axis=-1, keepdims=True)
                x = shift * lax.rsqrt(var + EPS) * gamma + beta
            elif c == "d":
                # TODO(synk): Dropout implemented in eval mode (identity);
                # nn.Dropout is a no-op at inference time.
                pass
        o_ref[...] = x.astype(o_ref.dtype)

    return kernel


def gran_pre_post_process(x, prev, scale, bias, *, cmd: str,
                          dropout_rate=None, tile_rows=None):
    """Fused residual-add + layernorm (+ eval-mode dropout) Pallas call.

    x: (B, S, H); prev: (B, S, H) or None; scale, bias: (H,) layernorm params.
    """
    del dropout_rate  # identity at inference
    B, S, H = x.shape
    rows = B * S
    has_prev = (prev is not None) and ("a" in cmd)

    x2 = x.reshape(rows, H)
    prev2 = prev.reshape(rows, H) if has_prev else None
    scale2 = scale.reshape(1, H).astype(jnp.float32)
    bias2 = bias.reshape(1, H).astype(jnp.float32)

    # ---- choose row tile: biggest that fits a ~24 MiB streaming budget ----
    if tile_rows is None:
        xb = jnp.dtype(x.dtype).itemsize
        pb = jnp.dtype(prev.dtype).itemsize if has_prev else 0
        # x + (prev) + out, double-buffered, plus ~2 f32 temporaries in-body.
        per_row_bytes = H * ((2 * xb + pb) * 2 + 2 * 4)
        budget = 24 * 1024 * 1024
        tile_rows = max(8, min(1024, (budget // per_row_bytes) // 8 * 8))
        # Keep at least 2 grid steps so the parallel axis can shard across
        # v7x's two TensorCores.
        tile_rows = min(tile_rows, max(8, _round_up(pl.cdiv(rows, 2), 8)))
    tile_rows = max(8, _round_up(int(tile_rows), 8))
    tile_rows = min(tile_rows, _round_up(rows, 8))

    # Pad rows (wrapper-side) instead of asserting divisibility; padded rows
    # are computed but sliced off afterwards (zeros are safe: var+eps > 0).
    padded_rows = _round_up(rows, tile_rows)
    if padded_rows != rows:
        pad = padded_rows - rows
        x2 = jnp.pad(x2, ((0, pad), (0, 0)))
        if prev2 is not None:
            prev2 = jnp.pad(prev2, ((0, pad), (0, 0)))

    grid = (padded_rows // tile_rows,)
    row_spec = pl.BlockSpec((tile_rows, H), lambda i: (i, 0))
    param_spec = pl.BlockSpec((1, H), lambda i: (0, 0))

    in_specs = [row_spec]
    operands = [x2]
    if has_prev:
        in_specs.append(row_spec)
        operands.append(prev2)
    in_specs += [param_spec, param_spec]
    operands += [scale2, bias2]

    kernel = _make_kernel(cmd, has_prev)

    out = pl.pallas_call(
        kernel,
        out_shape=jax.ShapeDtypeStruct((padded_rows, H), x.dtype),
        grid_spec=pltpu.PrefetchScalarGridSpec(
            num_scalar_prefetch=0,
            grid=grid,
            in_specs=in_specs,
            out_specs=row_spec,
        ),
        compiler_params=pltpu.CompilerParams(
            dimension_semantics=("parallel",),
            # Large row tiles need more than the default scoped-VMEM limit;
            # 48 MiB stays within v7x's 64 MiB-per-TC physical VMEM.
            vmem_limit_bytes=48 * 1024 * 1024,
        ),
    )(*operands)

    if padded_rows != rows:
        out = out[:rows]
    return out.reshape(B, S, H)


def _reference(x, prev, scale, bias, cmd: str):
    """Pure-JAX reference mirroring the PyTorch forward (eval mode)."""
    out = x.astype(jnp.float32)
    prev_f = None if prev is None else prev.astype(jnp.float32)
    for c in cmd:
        if c == "a":
            if prev_f is not None:
                out = prev_f + out
        elif c == "n":
            mean = jnp.mean(out, axis=-1, keepdims=True)
            shift = out - mean
            var = jnp.mean(shift * shift, axis=-1, keepdims=True)
            out = shift * lax.rsqrt(var + EPS) * scale + bias
        elif c == "d":
            pass  # eval-mode dropout
    return out.astype(x.dtype)


if __name__ == "__main__":
    # Small shapes consistent with the module: (batch, seq, hidden)
    B, S, H = 2, 8, 32
    cmd = "and"          # residual add -> layernorm -> dropout (eval)
    dropout_rate = 0.1   # inference => identity

    key = jax.random.PRNGKey(0)
    kx, kp = jax.random.split(key)
    x = jax.random.normal(kx, (B, S, H), dtype=jnp.float32)
    prev = jax.random.normal(kp, (B, S, H), dtype=jnp.float32)

    # Parameters exactly as in GranLayerNorm.__init__: scale=1.0, bias=0.0
    scale = jnp.full((H,), 1.0, dtype=jnp.float32)
    bias = jnp.full((H,), 0.0, dtype=jnp.float32)

    # Path 1: with residual input (kernel variant that streams `prev`).
    out = gran_pre_post_process(x, prev, scale, bias, cmd=cmd,
                                dropout_rate=dropout_rate)
    out = jax.block_until_ready(out)
    ref = _reference(x, prev, scale, bias, cmd)
    assert out.shape == (B, S, H)
    assert jnp.allclose(out, ref, atol=1e-5, rtol=1e-5), "mismatch (with prev)"

    # Path 2: prev=None -> 'a' is skipped and no dummy zeros are streamed.
    out2 = gran_pre_post_process(x, None, scale, bias, cmd=cmd,
                                 dropout_rate=dropout_rate)
    out2 = jax.block_until_ready(out2)
    ref2 = _reference(x, None, scale, bias, cmd)
    assert jnp.allclose(out2, ref2, atol=1e-5, rtol=1e-5), "mismatch (no prev)"

    print("KERNEL_OK")
</pallas_src>

<mosaic_0001>
module attributes {stable_mosaic.version = 11 : i64} {
  func.func @kernel(%arg0: i32, %arg1: memref<8x32xf32, #tpu.memory_space<vmem>>, %arg2: memref<8x32xf32, #tpu.memory_space<vmem>>, %arg3: memref<1x32xf32, #tpu.memory_space<vmem>>, %arg4: memref<1x32xf32, #tpu.memory_space<vmem>>, %arg5: memref<8x32xf32, #tpu.memory_space<vmem>>) attributes {dimension_semantics = [#tpu.dimension_semantics<parallel>], iteration_bounds = array<i64: 2>, scalar_prefetch = 0 : i64, scratch_operands = 0 : i64, tpu.core_type = #tpu.core_type<tc>, window_params = [{transform_indices = @transform_0, window_bounds = array<i64: 8, 32>}, {transform_indices = @transform_1, window_bounds = array<i64: 8, 32>}, {pipeline_mode = #tpu.pipeline_mode<synchronous>, transform_indices = @transform_2, window_bounds = array<i64: 1, 32>}, {pipeline_mode = #tpu.pipeline_mode<synchronous>, transform_indices = @transform_3, window_bounds = array<i64: 1, 32>}, {transform_indices = @transform_4, window_bounds = array<i64: 8, 32>}]} {
    %c0 = arith.constant 0 : index
    %c0_0 = arith.constant 0 : index
    %0 = vector.load %arg1[%c0, %c0_0] : memref<8x32xf32, #tpu.memory_space<vmem>>, vector<8x32xf32>
    %c0_1 = arith.constant 0 : index
    %c0_2 = arith.constant 0 : index
    %1 = vector.load %arg2[%c0_1, %c0_2] : memref<8x32xf32, #tpu.memory_space<vmem>>, vector<8x32xf32>
    %c0_3 = arith.constant 0 : index
    %c0_4 = arith.constant 0 : index
    %2 = vector.load %arg3[%c0_3, %c0_4] : memref<1x32xf32, #tpu.memory_space<vmem>>, vector<1x32xf32>
    %c0_5 = arith.constant 0 : index
    %c0_6 = arith.constant 0 : index
    %3 = vector.load %arg4[%c0_5, %c0_6] : memref<1x32xf32, #tpu.memory_space<vmem>>, vector<1x32xf32>
    %4 = arith.addf %0, %1 : vector<8x32xf32>
    %cst = arith.constant dense<0.000000e+00> : vector<8xf32>
    %5 = vector.multi_reduction <add>, %4, %cst [1] : vector<8x32xf32> to vector<8xf32>
    %6 = vector.shape_cast %5 : vector<8xf32> to vector<8x1xf32>
    %cst_7 = arith.constant 3.200000e+01 : f32
    %7 = vector.broadcast %cst_7 : f32 to vector<8x1xf32>
    %8 = arith.divf %6, %7 : vector<8x1xf32>
    %9 = vector.broadcast %8 : vector<8x1xf32> to vector<8x32xf32>
    %10 = arith.subf %4, %9 : vector<8x32xf32>
    %11 = arith.mulf %10, %10 : vector<8x32xf32>
    %cst_8 = arith.constant dense<0.000000e+00> : vector<8xf32>
    %12 = vector.multi_reduction <add>, %11, %cst_8 [1] : vector<8x32xf32> to vector<8xf32>
    %13 = vector.shape_cast %12 : vector<8xf32> to vector<8x1xf32>
    %cst_9 = arith.constant 3.200000e+01 : f32
    %14 = vector.broadcast %cst_9 : f32 to vector<8x1xf32>
    %15 = arith.divf %13, %14 : vector<8x1xf32>
    %cst_10 = arith.constant 9.99999996E-13 : f32
    %16 = vector.broadcast %cst_10 : f32 to vector<8x1xf32>
    %17 = arith.addf %15, %16 : vector<8x1xf32>
    %18 = math.rsqrt %17 : vector<8x1xf32>
    %19 = vector.broadcast %18 : vector<8x1xf32> to vector<8x32xf32>
    %20 = arith.mulf %10, %19 : vector<8x32xf32>
    %21 = vector.broadcast %2 : vector<1x32xf32> to vector<8x32xf32>
    %22 = arith.mulf %20, %21 : vector<8x32xf32>
    %23 = vector.broadcast %3 : vector<1x32xf32> to vector<8x32xf32>
    %24 = arith.addf %22, %23 : vector<8x32xf32>
    %c0_11 = arith.constant 0 : index
    %c0_12 = arith.constant 0 : index
    %25 = vector.load %arg5[%c0_11, %c0_12] : memref<8x32xf32, #tpu.memory_space<vmem>>, vector<8x32xf32>
    tpu.vector_store %arg5[%c0_11, %c0_12], %24 {strides = array<i32>} : memref<8x32xf32, #tpu.memory_space<vmem>>, vector<8x32xf32>,
    return
  }
  func.func @transform_0(%arg0: i32) -> (i32, i32) {
    %c0_i32 = arith.constant 0 : i32
    %c0_i32_0 = arith.constant 0 : i32
    return %arg0, %c0_i32 : i32, i32
  }
  func.func @transform_1(%arg0: i32) -> (i32, i32) {
    %c0_i32 = arith.constant 0 : i32
    %c0_i32_0 = arith.constant 0 : i32
    return %arg0, %c0_i32 : i32, i32
  }
  func.func @transform_2(%arg0: i32) -> (i32, i32) {
    %c0_i32 = arith.constant 0 : i32
    %c0_i32_0 = arith.constant 0 : i32
    %c0_i32_1 = arith.constant 0 : i32
    return %c0_i32, %c0_i32_0 : i32, i32
  }
  func.func @transform_3(%arg0: i32) -> (i32, i32) {
    %c0_i32 = arith.constant 0 : i32
    %c0_i32_0 = arith.constant 0 : i32
    %c0_i32_1 = arith.constant 0 : i32
    return %c0_i32, %c0_i32_0 : i32, i32
  }
  func.func @transform_4(%arg0: i32) -> (i32, i32) {
    %c0_i32 = arith.constant 0 : i32
    %c0_i32_0 = arith.constant 0 : i32
    return %arg0, %c0_i32 : i32, i32
  }
}

</mosaic_0001>

<llo_original>
// kernel: tpu_custom_call.1
$region0: #{tpu_custom_call.1}
  #allocation0 [shape = 'u32[]', space=smem, size = 0x4, offset = 0x4, fixed_abs, tag = 'smem constant byte address 0x4 - core index']
  #allocation1 [shape = 'u32[72,128]{1,0:T(1,128)}', space=vmem, size = 0x9000, scoped, tag = 'internal scratch']
  %s0 = inlined_call_operand.hbm [shape: f32[16,32], index: 0, kind: input, shape index: {}]
  %s1 = inlined_call_operand.hbm [shape: f32[16,32], index: 1, kind: input, shape index: {}]
  %s2 = inlined_call_operand.vmem [shape: f32[1,32], index: 2, kind: input, shape index: {}]
  %s3 = inlined_call_operand.vmem [shape: f32[1,32], index: 3, kind: input, shape index: {}]
  %s4 = inlined_call_operand.hbm [shape: f32[16,32], index: 4, kind: output, shape index: {}]
  %s5 = sld [smem:[#allocation0]]
  $region57: #{tpu_custom_call.1} parent=0
    _
  %s7 = ssub.s32 1, %s5
  %s8 = scalar_select 0, %s7, %s5
  $region1: #{tpu_custom_call.1} parent=0
    #allocation2 [shape = 'u8[8192]{0}', space=vmem, size = 0x2000, scoped, tag = 'input window, operand 0']
    #allocation3 [shape = 's32[2]{0}', space=sflag, size = 0x8, scoped, tag = 'scoped memory for tpu_custom_call.1']
    #allocation4 [shape = 's32[2]{0}', space=sflag, size = 0x8, scoped, tag = 'scoped memory for tpu_custom_call.1']
    #allocation5 [shape = 'u8[8192]{0}', space=vmem, size = 0x2000, scoped, tag = 'input window, operand 1']
    #allocation6 [shape = 's32[2]{0}', space=sflag, size = 0x8, scoped, tag = 'scoped memory for tpu_custom_call.1']
    #allocation7 [shape = 'u8[8192]{0}', space=vmem, size = 0x2000, scoped, tag = 'output window, operand 0']
    %9 = vsyncpa [#allocation3], 0
    %s10 = scalar_lea.sflag [#allocation3], 1
    %11 = vsyncpa %s10, 0
    %12 = vsyncpa [#allocation6], 0
    %s13 = scalar_lea.sflag [#allocation6], 1
    %14 = vsyncpa %s13, 0
    %15 = vsyncpa [#allocation4], 0
    %s16 = scalar_lea.sflag [#allocation4], 1
    %17 = vsyncpa %s16, 0
    loop: start=0, step=1, limit=4
    $region2: #{tpu_custom_call.1} parent=1 // loop_pre_header
      _
    $region3: #{tpu_custom_call.1} parent=1 // loop_header
      %s19 = sphi 0, %s23
      %p20 = scmp.ge.s32.totalorder %s19, 4
      %s29 = sphi 0, %s31
      %s32 = sphi 0, %s29
      %s33 = sphi 0, %s32
      %s49 = sphi 0, %s33
      %s55 = sphi 0, %s57
      %s58 = sphi 0, %s55
      %s59 = sphi 0, %s58
      %s75 = sphi 0, %s59
      %s79 = sphi 0, %s79
      %s81 = sphi 0, %s79
      %s82 = sphi 0, %s81
      %s96 = sphi 0, %s82
      %s100 = sphi 0, %s100
      %s102 = sphi 0, %s100
      %s103 = sphi 0, %s102
      %s117 = sphi 0, %s103
      %s123 = sphi 0, %s125
      %s126 = sphi 0, %s123
      %s127 = sphi 0, %s126
      %s143 = sphi 0, %s127
    $region4: #{tpu_custom_call.1} parent=1 // loop_header_branch
      %22 = sbr.rel (%p20) target = $region8
    $region5: #{tpu_custom_call.1} parent=1 // loop_body
      %s24 = ssub.s32 %s19, 1
      %s25 = ssub.s32 %s19, 2
      %s26 = sadd.s32 %s19, 1
      %s27 = ssub.s32 %s19, %s26
      %p28 = scmp.eq.s32.totalorder %s27, 0
      %s30 = sadd.s32 %s29, 1
      %s31 = scalar_select %p28, %s29, %s30
      %p34 = pneg %p28
      %p35 = scmp.eq.s32.totalorder %s19, 1
      %p36 = por %p34, %p35
      %p37 = scmp.ne.s32.totalorder %s29, %s32
      %p38 = scmp.eq.s32.totalorder %s19, 0
      %p39 = por %p37, %p38
      %p40 = scmp.ne.s32.totalorder %s29, %s32
      %p41 = scmp.eq.s32.totalorder %s24, 1
      %p42 = por %p40, %p41
      %p43 = scmp.ne.s32.totalorder %s32, %s33
      %p44 = scmp.eq.s32.totalorder %s24, 0
      %p45 = por %p43, %p44
      %p46 = scmp.ne.s32.totalorder %s32, %s33
      %p47 = scmp.eq.s32.totalorder %s25, 1
      %p48 = por %p46, %p47
      %p50 = scmp.ne.s32.totalorder %s33, %s49
      %p51 = scmp.eq.s32.totalorder %s25, 0
      %p52 = por %p50, %p51
      %s53 = ssub.s32 %s19, %s26
      %p54 = scmp.eq.s32.totalorder %s53, 0
      %s56 = sadd.s32 %s55, 1
      %s57 = scalar_select %p54, %s55, %s56
      %p60 = pneg %p54
      %p61 = scmp.eq.s32.totalorder %s19, 1
      %p62 = por %p60, %p61
      %p63 = scmp.ne.s32.totalorder %s55, %s58
      %p64 = scmp.eq.s32.totalorder %s19, 0
      %p65 = por %p63, %p64
      %p66 = scmp.ne.s32.totalorder %s55, %s58
      %p67 = scmp.eq.s32.totalorder %s24, 1
      %p68 = por %p66, %p67
      %p69 = scmp.ne.s32.totalorder %s58, %s59
      %p70 = scmp.eq.s32.totalorder %s24, 0
      %p71 = por %p69, %p70
      %p72 = scmp.ne.s32.totalorder %s58, %s59
      %p73 = scmp.eq.s32.totalorder %s25, 1
      %p74 = por %p72, %p73
      %p76 = scmp.ne.s32.totalorder %s59, %s75
      %p77 = scmp.eq.s32.totalorder %s25, 0
      %p78 = por %p76, %p77
      %s80 = sadd.s32 %s79, 1
      %p83 = scmp.eq.s32.totalorder %s19, 1
      %p84 = scmp.ne.s32.totalorder %s79, %s81
      %p85 = scmp.eq.s32.totalorder %s19, 0
      %p86 = por %p84, %p85
      %p87 = scmp.ne.s32.totalorder %s79, %s81
      %p88 = scmp.eq.s32.totalorder %s24, 1
      %p89 = por %p87, %p88
      %p90 = scmp.ne.s32.totalorder %s81, %s82
      %p91 = scmp.eq.s32.totalorder %s24, 0
      %p92 = por %p90, %p91
      %p93 = scmp.ne.s32.totalorder %s81, %s82
      %p94 = scmp.eq.s32.totalorder %s25, 1
      %p95 = por %p93, %p94
      %p97 = scmp.ne.s32.totalorder %s82, %s96
      %p98 = scmp.eq.s32.totalorder %s25, 0
      %p99 = por %p97, %p98
      %s101 = sadd.s32 %s100, 1
      %p104 = scmp.eq.s32.totalorder %s19, 1
      %p105 = scmp.ne.s32.totalorder %s100, %s102
      %p106 = scmp.eq.s32.totalorder %s19, 0
      %p107 = por %p105, %p106
      %p108 = scmp.ne.s32.totalorder %s100, %s102
      %p109 = scmp.eq.s32.totalorder %s24, 1
      %p110 = por %p108, %p109
      %p111 = scmp.ne.s32.totalorder %s102, %s103
      %p112 = scmp.eq.s32.totalorder %s24, 0
      %p113 = por %p111, %p112
      %p114 = scmp.ne.s32.totalorder %s102, %s103
      %p115 = scmp.eq.s32.totalorder %s25, 1
      %p116 = por %p114, %p115
      %p118 = scmp.ne.s32.totalorder %s103, %s117
      %p119 = scmp.eq.s32.totalorder %s25, 0
      %p120 = por %p118, %p119
      %s121 = ssub.s32 %s19, %s26
      %p122 = scmp.eq.s32.totalorder %s121, 0
      %s124 = sadd.s32 %s123, 1
      %s125 = scalar_select %p122, %s123, %s124
      %p128 = pneg %p122
      %p129 = scmp.eq.s32.totalorder %s19, 1
      %p130 = por %p128, %p129
      %p131 = scmp.ne.s32.totalorder %s123, %s126
      %p132 = scmp.eq.s32.totalorder %s19, 0
      %p133 = por %p131, %p132
      %p134 = scmp.ne.s32.totalorder %s123, %s126
      %p135 = scmp.eq.s32.totalorder %s24, 1
      %p136 = por %p134, %p135
      %p137 = scmp.ne.s32.totalorder %s126, %s127
      %p138 = scmp.eq.s32.totalorder %s24, 0
      %p139 = por %p137, %p138
      %p140 = scmp.ne.s32.totalorder %s126, %s127
      %p141 = scmp.eq.s32.totalorder %s25, 1
      %p142 = por %p140, %p141
      %p144 = scmp.ne.s32.totalorder %s127, %s143
      %p145 = scmp.eq.s32.totalorder %s25, 0
      %p146 = por %p144, %p145
      %p147 = scmp.le.s32.totalorder 1, %s19
      %p148 = scmp.lt.s32.totalorder %s19, 3
      %p149 = pnand %p147, %p148
      %p150 = pneg %p149
      // Predicated region
      $region9: #{tpu_custom_call.1} parent=5 // pred_check
        _
      $region10: #{tpu_custom_call.1} parent=5 // pred_check_branch
        %152 = sbr.rel (%p149) target = $region12
      $region11: #{tpu_custom_call.1} parent=5 // pred_region
        %s153 = ssub.s32 %s19, 1
        // Predicated region
        $region13: #{tpu_custom_call.1} parent=11 // pred_check
          %p154 = pneg %p92
        $region14: #{tpu_custom_call.1} parent=11 // pred_check_branch
          %156 = sbr.rel (%p154) target = $region16
        $region15: #{tpu_custom_call.1} parent=11 // pred_region
          _
        $region16: #{tpu_custom_call.1} parent=11 // pred_fallthru
          _
        // Predicated region
        $region17: #{tpu_custom_call.1} parent=11 // pred_check
          %p157 = pneg %p113
        $region18: #{tpu_custom_call.1} parent=11 // pred_check_branch
          %159 = sbr.rel (%p157) target = $region20
        $region19: #{tpu_custom_call.1} parent=11 // pred_region
          _
        $region20: #{tpu_custom_call.1} parent=11 // pred_fallthru
          _
      $region12: #{tpu_custom_call.1} parent=5 // pred_fallthru
        _
      %p160 = scmp.lt.s32.totalorder %s19, 2
      // Predicated region
      $region21: #{tpu_custom_call.1} parent=5 // pred_check
        %p161 = pneg %p160
      $region22: #{tpu_custom_call.1} parent=5 // pred_check_branch
        %163 = sbr.rel (%p161) target = $region24
      $region23: #{tpu_custom_call.1} parent=5 // pred_region
        // Predicated region
        $region25: #{tpu_custom_call.1} parent=23 // pred_check
          %p164 = pneg %p39
        $region26: #{tpu_custom_call.1} parent=23 // pred_check_branch
          %166 = sbr.rel (%p164) target = $region28
        $region27: #{tpu_custom_call.1} parent=23 // pred_region
          %s167 = sand.u32 %s29, 1
          %s168 = scalar_lea.sflag [#allocation3], %s167
          %s169 = sand.u32 %s29, 1
          %s170 = smul.addr %s169, 8
          %s171 = scalar_lea.vmem [#allocation2], %s170
          %173 = vsyncadd %s168, 0
          %s174 = smul.addr %s19, 8
          %s175 = scalar_lea.hbm %s0, %s174
          %s177 = sshll.u32 %s175, 4
          %s178 = int_to_ptr.hbm [resolvable:$true] %s177
          %s179 = sshll.u32 %s171, 4
          %s180 = int_to_ptr.vmem [resolvable:$true] %s179
          %182 = dma.hbm_to_vmem [thread:$0]  %s178, 128, %s180, %s168
        $region28: #{tpu_custom_call.1} parent=23 // pred_fallthru
          _
        // Predicated region
        $region29: #{tpu_custom_call.1} parent=23 // pred_check
          %p183 = pneg %p65
        $region30: #{tpu_custom_call.1} parent=23 // pred_check_branch
          %185 = sbr.rel (%p183) target = $region32
        $region31: #{tpu_custom_call.1} parent=23 // pred_region
          %s186 = sand.u32 %s55, 1
          %s187 = scalar_lea.sflag [#allocation6], %s186
          %s188 = sand.u32 %s55, 1
          %s189 = smul.addr %s188, 8
          %s190 = scalar_lea.vmem [#allocation5], %s189
          %192 = vsyncadd %s187, 0
          %s193 = smul.addr %s19, 8
          %s194 = scalar_lea.hbm %s1, %s193
          %s196 = sshll.u32 %s194, 4
          %s197 = int_to_ptr.hbm [resolvable:$true] %s196
          %s198 = sshll.u32 %s190, 4
          %s199 = int_to_ptr.vmem [resolvable:$true] %s198
          %201 = dma.hbm_to_vmem [thread:$0]  %s197, 128, %s199, %s187
        $region32: #{tpu_custom_call.1} parent=23 // pred_fallthru
          _
      $region24: #{tpu_custom_call.1} parent=5 // pred_fallthru
        _
      %p202 = scmp.le.s32.totalorder 1, %s19
      %p203 = scmp.lt.s32.totalorder %s19, 3
      %p204 = pnand %p202, %p203
      %p205 = pneg %p204
      // Predicated region
      $region33: #{tpu_custom_call.1} parent=5 // pred_check
        _
      $region34: #{tpu_custom_call.1} parent=5 // pred_check_branch
        %207 = sbr.rel (%p204) target = $region36
      $region35: #{tpu_custom_call.1} parent=5 // pred_region
        %s208 = ssub.s32 %s19, 1
        %s209 = sand.u32 %s32, 1
        %s210 = scalar_lea.sflag [#allocation3], %s209
        %s211 = sand.u32 %s32, 1
        %s212 = smul.addr %s211, 8
        %s213 = scalar_lea.vmem [#allocation2], %s212
        // Predicated region
        $region37: #{tpu_custom_call.1} parent=35 // pred_check
          %p214 = pneg %p45
        $region38: #{tpu_custom_call.1} parent=35 // pred_check_branch
          %216 = sbr.rel (%p214) target = $region40
        $region39: #{tpu_custom_call.1} parent=35 // pred_region
          %218 = dma.done %s210, 128
        $region40: #{tpu_custom_call.1} parent=35 // pred_fallthru
          _
        %s219 = sand.u32 %s58, 1
        %s220 = scalar_lea.sflag [#allocation6], %s219
        %s221 = sand.u32 %s58, 1
        %s222 = smul.addr %s221, 8
        %s223 = scalar_lea.vmem [#allocation5], %s222
        // Predicated region
        $region41: #{tpu_custom_call.1} parent=35 // pred_check
          %p224 = pneg %p71
        $region42: #{tpu_custom_call.1} parent=35 // pred_check_branch
          %226 = sbr.rel (%p224) target = $region44
        $region43: #{tpu_custom_call.1} parent=35 // pred_region
          %228 = dma.done %s220, 128
        $region44: #{tpu_custom_call.1} parent=35 // pred_fallthru
          _
        %s229 = sand.u32 %s32, 1
        %s230 = scalar_lea.sflag [#allocation3], %s229
        %s231 = sand.u32 %s32, 1
        %s232 = smul.addr %s231, 8
        %s233 = scalar_lea.vmem [#allocation2], %s232
        %p234 = pneg %p45
        %p235 = pneg %p42
        %s236 = sand.u32 %s58, 1
        %s237 = scalar_lea.sflag [#allocation6], %s236
        %s238 = sand.u32 %s58, 1
        %s239 = smul.addr %s238, 8
        %s240 = scalar_lea.vmem [#allocation5], %s239
        %p241 = pneg %p71
        %p242 = pneg %p68
        %p243 = pneg %p92
        %p244 = pneg %p89
        %p245 = pneg %p113
        %p246 = pneg %p110
        %p247 = pneg %p139
        %p248 = pneg %p136
        %s249 = sand.u32 %s126, 1
        %s250 = scalar_lea.sflag [#allocation4], %s249
        %s251 = sand.u32 %s126, 1
        %s252 = smul.addr %s251, 8
        %s253 = scalar_lea.vmem [#allocation7], %s252
        %v254 = vld [vmem:[%s213] sm:$0xff]
        %v255 = vld [vmem:[%s223] sm:$0xff]
        %v256 = vld [vmem:[%s2] sm:$0x1]
        %v257 = vld [vmem:[%s3] sm:$0x1]
        %v258 = vadd.f32 %v254, %v255
        %vm259 = vcmask 261120
        %v260 = vsel %vm259, %v258, 0.0
        %261 = vadd.xlane.f32.xlu0 %v260
        %v262 = vpop.xlane.xlu0 %261
        %v263 = vrcp.pop 32.0
        %v264 = vmul.f32 32.0, %v263
        %v265 = vsub.f32 1.0, %v264
        %v266 = vmul.f32 %v263, %v265
        %v267 = vadd.f32 %v263, %v266
        %vm268 = vweird.f32 %v263
        %v269 = vsel %vm268, %v263, %v267
        %v270 = vmul.f32 %v262, %v269
        %v271 = vsub.f32 %v258, %v270
        %v272 = vmul.f32 %v271, %v271
        %v273 = vsel %vm259, %v272, 0.0
        %274 = vadd.xlane.f32.xlu0 %v273
        %v275 = vpop.xlane.xlu0 %274
        %v276 = vmul.f32 %v275, %v269
        %v277 = vadd.f32 %v276, 1e-12
        %v278 = vrsqrt.pop %v277
        %v279 = vmul.f32 %v278, %v277
        %v280 = vmul.f32 %v279, %v278
        %v281 = vmul.f32 0.5, %v280
        %v282 = vsub.f32 1.5, %v281
        %v283 = vmul.f32 %v278, %v282
        %vm284 = vweird.f32 %v277
        %vm285 = vweird.f32 %v278
        %vm286 = vmor %vm284, %vm285
        %v287 = vsel %vm286, %v278, %v283
        %v288 = vmul.f32 %v271, %v287
        %v290 = vperm.slane %v256, 0
        %v292 = vmul.f32 %v288, %v290
        %v294 = vperm.slane %v257, 0
        %v296 = vadd.f32 %v292, %v294
        %297 = vst.msk [vmem:[%s253] sm:$0xff] %vm259, %v296
        %s298 = sand.u32 %s126, 1
        %s299 = scalar_lea.sflag [#allocation4], %s298
        %s300 = sand.u32 %s126, 1
        %s301 = smul.addr %s300, 8
        %s302 = scalar_lea.vmem [#allocation7], %s301
        // Predicated region
        $region45: #{tpu_custom_call.1} parent=35 // pred_check
          %p303 = pneg %p136
        $region46: #{tpu_custom_call.1} parent=35 // pred_check_branch
          %305 = sbr.rel (%p303) target = $region48
        $region47: #{tpu_custom_call.1} parent=35 // pred_region
          %307 = vsyncadd %s299, 0
          %s308 = smul.addr %s24, 8
          %s309 = scalar_lea.hbm %s4, %s308
          %s311 = sshll.u32 %s302, 4
          %s312 = int_to_ptr.vmem [resolvable:$true] %s311
          %s313 = sshll.u32 %s309, 4
          %s314 = int_to_ptr.hbm [resolvable:$true] %s313
          %316 = dma.vmem_to_hbm [thread:$0]  %s312, 128, %s314, %s299
        $region48: #{tpu_custom_call.1} parent=35 // pred_fallthru
          _
      $region36: #{tpu_custom_call.1} parent=5 // pred_fallthru
        _
      %p317 = scmp.le.s32.totalorder 2, %s19
      // Predicated region
      $region49: #{tpu_custom_call.1} parent=5 // pred_check
        %p318 = pneg %p317
      $region50: #{tpu_custom_call.1} parent=5 // pred_check_branch
        %320 = sbr.rel (%p318) target = $region52
      $region51: #{tpu_custom_call.1} parent=5 // pred_region
        %s321 = ssub.s32 %s19, 2
        // Predicated region
        $region53: #{tpu_custom_call.1} parent=51 // pred_check
          %p322 = pneg %p142
        $region54: #{tpu_custom_call.1} parent=51 // pred_check_branch
          %324 = sbr.rel (%p322) target = $region56
        $region55: #{tpu_custom_call.1} parent=51 // pred_region
          %s325 = sand.u32 %s127, 1
          %s326 = scalar_lea.sflag [#allocation4], %s325
          %s327 = sand.u32 %s127, 1
          %s328 = smul.addr %s327, 8
          %s329 = scalar_lea.vmem [#allocation7], %s328
          %331 = dma.done %s326, 128
        $region56: #{tpu_custom_call.1} parent=51 // pred_fallthru
          _
      $region52: #{tpu_custom_call.1} parent=5 // pred_fallthru
        _
    $region6: #{tpu_custom_call.1} parent=1 // loop_footer
      %s23 = sadd.s32 1, %s19
    $region7: #{tpu_custom_call.1} parent=1 // loop_footer_branch
      %18 = sbr.rel target = $region3
    $region8: #{tpu_custom_call.1} parent=1 // loop_exit
      _
    %332 = vsyncpa [#allocation3], 1
    %s333 = scalar_lea.sflag [#allocation3], 1
    %334 = vsyncpa %s333, 1
    %335 = vsyncpa [#allocation6], 1
    %s336 = scalar_lea.sflag [#allocation6], 1
    %337 = vsyncpa %s336, 1
    %338 = vsyncpa [#allocation4], 1
    %s339 = scalar_lea.sflag [#allocation4], 1
    %340 = vsyncpa %s339, 1

</llo_original>
